<compile_context>
chip_gen: v6e
topology: v6e:2x2x1
jax: 0.10.0
libtpu: 0.0.40
codegen_flags: <defaults>
</compile_context>

<pallas_src>
import math

import jax
import jax.numpy as jnp
from jax.experimental import pallas as pl
from jax.experimental.pallas import tpu as pltpu


_VMEM_LIMIT = 64 * 1024 * 1024     # <= physical VMEM on v5e/v6e/v7x


def _pick_tile(n, prefs=(256, 128)):
    for p in prefs:
        if n >= p and n % p == 0:
            return p
    return n                        # full extent is always a legal block size


# ----------------------------------------------------------------------------
# Kernel 1: y = x @ W + b   (x, W bf16 on the MXU; accumulate in f32)
# ----------------------------------------------------------------------------
def _linear_kernel(x_ref, w_ref, b_ref, o_ref):
    acc = jnp.dot(x_ref[...], w_ref[...], preferred_element_type=jnp.float32)
    o_ref[...] = (acc + b_ref[...]).astype(o_ref.dtype)


def _linear(x, w, b, out_dtype):
    """x: (M, Din) bf16, w: (Din, Dout) bf16, b: (1, Dout) f32."""
    M, Din = x.shape
    Dout = w.shape[1]
    tm = _pick_tile(M)
    tn = _pick_tile(Dout)
    return pl.pallas_call(
        _linear_kernel,
        out_shape=jax.ShapeDtypeStruct((M, Dout), out_dtype),
        grid=(M // tm, Dout // tn),
        in_specs=[
            pl.BlockSpec((tm, Din), lambda i, j: (i, 0)),
            pl.BlockSpec((Din, tn), lambda i, j: (0, j)),
            pl.BlockSpec((1, tn), lambda i, j: (0, j)),
        ],
        out_specs=pl.BlockSpec((tm, tn), lambda i, j: (i, j)),
        compiler_params=pltpu.CompilerParams(
            dimension_semantics=("parallel", "parallel"),
            vmem_limit_bytes=_VMEM_LIMIT),
    )(x, w, b)


# ----------------------------------------------------------------------------
# Kernel 2: flash attention over all heads at once (online softmax)
# ----------------------------------------------------------------------------
def _flash_kernel(q_ref, k_ref, v_ref, mask_ref, o_ref, m_s, l_s, acc_s):
    kv = pl.program_id(2)

    @pl.when(kv == 0)
    def _():
        m_s[...] = jnp.full_like(m_s, -jnp.inf)
        l_s[...] = jnp.zeros_like(l_s)
        acc_s[...] = jnp.zeros_like(acc_s)

    q = q_ref[0]                     # (H, TQ, dk)  bf16, scale pre-folded
    k = k_ref[0]                     # (H, TKV, dk) bf16
    v = v_ref[0]                     # (H, TKV, dk) bf16

    # batched per-head score matmul: (H, TQ, TKV) f32
    s = jnp.einsum("hqd,hkd->hqk", q, k, preferred_element_type=jnp.float32)

    # masked_fill(mask == 0, -1e9); keep-flags come in as int8
    masked = mask_ref[0] == 0        # (TQ, TKV) bool
    s = jnp.where(masked[None, :, :], -1000000000.0, s)

    m_prev = m_s[...]                                        # (H, TQ, 1)
    m_new = jnp.maximum(m_prev, jnp.max(s, axis=-1, keepdims=True))
    alpha = jnp.exp(m_prev - m_new)
    p = jnp.exp(s - m_new)                                   # (H, TQ, TKV) f32
    # TODO(synk): attention-score dropout omitted (eval mode / p=0 -> identity)
    l_s[...] = alpha * l_s[...] + jnp.sum(p, axis=-1, keepdims=True)
    acc_s[...] = alpha * acc_s[...] + jnp.einsum(
        "hqk,hkd->hqd", p.astype(v.dtype), v,
        preferred_element_type=jnp.float32)
    m_s[...] = m_new

    @pl.when(kv == pl.num_programs(2) - 1)
    def _():
        inv_l = pl.reciprocal(l_s[...], approx=True)         # EUP, not VALU
        o_ref[0] = (acc_s[...] * inv_l).astype(o_ref.dtype)


# ----------------------------------------------------------------------------
# Wrapper (forward pass of MultiHeadAttentionBlock)
# ----------------------------------------------------------------------------
def multi_head_attention(q, k, v, mask, params, heads):
    B, S, D = q.shape
    d_k = D // heads
    wq, bq, wk, bk, wv, bv, wo, bo = params

    # Reference quirk: cal_attention uses d_k = query.shape[1], which after the
    # (B, H, S, d_k) transpose is `heads`.  Fold 1/sqrt(heads) into w_q / b_q.
    scale = 1.0 / math.sqrt(heads)

    bf16 = jnp.bfloat16
    wq_t = (wq.T * scale).astype(bf16)
    bq_s = (bq * scale).reshape(1, D).astype(jnp.float32)
    wk_t = wk.T.astype(bf16)
    bk_2 = bk.reshape(1, D).astype(jnp.float32)
    wv_t = wv.T.astype(bf16)
    bv_2 = bv.reshape(1, D).astype(jnp.float32)
    wo_t = wo.T.astype(bf16)
    bo_2 = bo.reshape(1, D).astype(jnp.float32)

    # ---- Q/K/V projections as single (B*S, D) @ (D, D) matmuls ----
    qp = _linear(q.reshape(B * S, D).astype(bf16), wq_t, bq_s, bf16)
    kp = _linear(k.reshape(B * S, D).astype(bf16), wk_t, bk_2, bf16)
    vp = _linear(v.reshape(B * S, D).astype(bf16), wv_t, bv_2, bf16)

    # head-major layout so the attention kernel batches all heads in one einsum
    qh = qp.reshape(B, S, heads, d_k).transpose(0, 2, 1, 3)   # (B, H, S, dk)
    kh = kp.reshape(B, S, heads, d_k).transpose(0, 2, 1, 3)
    vh = vp.reshape(B, S, heads, d_k).transpose(0, 2, 1, 3)

    # mask (Bm, 1, S, S) -> int8 keep-flags (Bm, S, S): 4x less HBM->VMEM DMA
    keep = (mask[:, 0, :, :] != 0).astype(jnp.int8)
    mb = keep.shape[0]
    mask_map = (lambda b, qi, kv: (b, qi, kv)) if mb > 1 \
        else (lambda b, qi, kv: (0, qi, kv))

    tq = _pick_tile(S, prefs=(128,))
    tkv = _pick_tile(S, prefs=(128,))

    attn = pl.pallas_call(
        _flash_kernel,
        out_shape=jax.ShapeDtypeStruct((B, heads, S, d_k), bf16),
        grid=(B, S // tq, S // tkv),
        in_specs=[
            pl.BlockSpec((1, heads, tq, d_k), lambda b, qi, kv: (b, 0, qi, 0)),
            pl.BlockSpec((1, heads, tkv, d_k), lambda b, qi, kv: (b, 0, kv, 0)),
            pl.BlockSpec((1, heads, tkv, d_k), lambda b, qi, kv: (b, 0, kv, 0)),
            pl.BlockSpec((1, tq, tkv), mask_map),
        ],
        out_specs=pl.BlockSpec((1, heads, tq, d_k), lambda b, qi, kv: (b, 0, qi, 0)),
        scratch_shapes=[
            pltpu.VMEM((heads, tq, 1), jnp.float32),     # running max m
            pltpu.VMEM((heads, tq, 1), jnp.float32),     # running denom l
            pltpu.VMEM((heads, tq, d_k), jnp.float32),   # output accumulator
        ],
        compiler_params=pltpu.CompilerParams(
            dimension_semantics=("parallel", "parallel", "arbitrary"),
            vmem_limit_bytes=_VMEM_LIMIT),
    )(qh, kh, vh, keep)

    # (B, H, S, dk) -> transpose(1,2).reshape(B*S, D), then output projection
    x2 = attn.transpose(0, 2, 1, 3).reshape(B * S, D)
    out = _linear(x2, wo_t, bo_2, q.dtype)
    return out.reshape(B, S, D)


# ----------------------------------------------------------------------------
# Pure-JAX reference (matches the torch module, eval mode)
# ----------------------------------------------------------------------------
def mha_reference(q, k, v, mask, params, heads):
    wq, bq, wk, bk, wv, bv, wo, bo = params
    B, S, D = q.shape
    dk = D // heads
    qp = q @ wq.T + bq
    kp = k @ wk.T + bk
    vp = v @ wv.T + bv
    qh = qp.reshape(B, S, heads, dk).transpose(0, 2, 1, 3)
    kh = kp.reshape(B, S, heads, dk).transpose(0, 2, 1, 3)
    vh = vp.reshape(B, S, heads, dk).transpose(0, 2, 1, 3)
    scale = 1.0 / math.sqrt(heads)          # same quirk as the reference
    s = jnp.einsum("bhqd,bhkd->bhqk", qh, kh) * scale
    s = jnp.where(mask == 0, -1000000000.0, s)
    a = jax.nn.softmax(s, axis=-1)
    x = jnp.einsum("bhqk,bhkd->bhqd", a, vh)
    x = x.transpose(0, 2, 1, 3).reshape(B, S, D)
    return x @ wo.T + bo


def init_params(key, d_model):
    keys = jax.random.split(key, 8)
    scale = 0.02
    wq = scale * jax.random.normal(keys[0], (d_model, d_model), jnp.float32)
    bq = scale * jax.random.normal(keys[1], (d_model,), jnp.float32)
    wk = scale * jax.random.normal(keys[2], (d_model, d_model), jnp.float32)
    bk = scale * jax.random.normal(keys[3], (d_model,), jnp.float32)
    wv = scale * jax.random.normal(keys[4], (d_model, d_model), jnp.float32)
    bv = scale * jax.random.normal(keys[5], (d_model,), jnp.float32)
    wo = scale * jax.random.normal(keys[6], (d_model, d_model), jnp.float32)
    bo = scale * jax.random.normal(keys[7], (d_model,), jnp.float32)
    return (wq, bq, wk, bk, wv, bv, wo, bo)


if __name__ == "__main__":
    B, S, D, H = 2, 8, 32, 4          # batch, seq, d_model, heads

    root = jax.random.PRNGKey(0)
    k_params, k_q, k_k, k_v = jax.random.split(root, 4)

    params = init_params(k_params, D)
    q = jax.random.normal(k_q, (B, S, D), jnp.float32)
    k = jax.random.normal(k_k, (B, S, D), jnp.float32)
    v = jax.random.normal(k_v, (B, S, D), jnp.float32)
    # causal mask, broadcast over batch and heads (mask == 0 -> -1e9)
    mask = jnp.tril(jnp.ones((S, S), jnp.float32))[None, None, :, :]  # (1,1,S,S)

    out = multi_head_attention(q, k, v, mask, params, H)
    jax.block_until_ready(out)
    assert out.shape == (B, S, D)
    assert bool(jnp.isfinite(out).all())

    ref = mha_reference(q, k, v, mask, params, H)
    err = float(jnp.max(jnp.abs(out - ref)))
    assert err < 2e-2, f"max abs error vs reference too large: {err}"
    print("KERNEL_OK")
</pallas_src>

<mosaic_0001>
module attributes {stable_mosaic.version = 11 : i64} {
  func.func @_linear_kernel(%arg0: i32, %arg1: i32, %arg2: memref<16x32xbf16, #tpu.memory_space<vmem>>, %arg3: memref<32x32xbf16, #tpu.memory_space<vmem>>, %arg4: memref<1x32xf32, #tpu.memory_space<vmem>>, %arg5: memref<16x32xbf16, #tpu.memory_space<vmem>>) attributes {dimension_semantics = [#tpu.dimension_semantics<parallel>, #tpu.dimension_semantics<parallel>], iteration_bounds = array<i64: 1, 1>, scalar_prefetch = 0 : i64, scratch_operands = 0 : i64, tpu.core_type = #tpu.core_type<tc>, window_params = [{transform_indices = @transform_0, window_bounds = array<i64: 16, 32>}, {transform_indices = @transform_1, window_bounds = array<i64: 32, 32>}, {transform_indices = @transform_2, window_bounds = array<i64: 1, 32>}, {transform_indices = @transform_3, window_bounds = array<i64: 16, 32>}]} {
    %c0 = arith.constant 0 : index
    %c0_0 = arith.constant 0 : index
    %0 = vector.load %arg2[%c0, %c0_0] : memref<16x32xbf16, #tpu.memory_space<vmem>>, vector<16x32xbf16>
    %c0_1 = arith.constant 0 : index
    %c0_2 = arith.constant 0 : index
    %1 = vector.load %arg3[%c0_1, %c0_2] : memref<32x32xbf16, #tpu.memory_space<vmem>>, vector<32x32xbf16>
    %cst = arith.constant dense<0.000000e+00> : vector<16x32xf32>
    %2 = tpu.matmul %0, %1, %cst {dimension_numbers = #tpu.dot_dimension_numbers<[1], [0], [0], [1], [0, 0, 1, 1], [], []>} : vector<16x32xbf16>, vector<32x32xbf16>, vector<16x32xf32> -> vector<16x32xf32>
    %c0_3 = arith.constant 0 : index
    %c0_4 = arith.constant 0 : index
    %3 = vector.load %arg4[%c0_3, %c0_4] : memref<1x32xf32, #tpu.memory_space<vmem>>, vector<1x32xf32>
    %4 = vector.broadcast %3 : vector<1x32xf32> to vector<16x32xf32>
    %5 = arith.addf %2, %4 : vector<16x32xf32>
    %6 = arith.truncf %5 : vector<16x32xf32> to vector<16x32xbf16>
    %c0_5 = arith.constant 0 : index
    %c0_6 = arith.constant 0 : index
    %7 = vector.load %arg5[%c0_5, %c0_6] : memref<16x32xbf16, #tpu.memory_space<vmem>>, vector<16x32xbf16>
    tpu.vector_store %arg5[%c0_5, %c0_6], %6 {strides = array<i32>} : memref<16x32xbf16, #tpu.memory_space<vmem>>, vector<16x32xbf16>,
    return
  }
  func.func @transform_0(%arg0: i32, %arg1: i32) -> (i32, i32) {
    %c0_i32 = arith.constant 0 : i32
    %c0_i32_0 = arith.constant 0 : i32
    return %arg0, %c0_i32 : i32, i32
  }
  func.func @transform_1(%arg0: i32, %arg1: i32) -> (i32, i32) {
    %c0_i32 = arith.constant 0 : i32
    %c0_i32_0 = arith.constant 0 : i32
    return %c0_i32, %arg1 : i32, i32
  }
  func.func @transform_2(%arg0: i32, %arg1: i32) -> (i32, i32) {
    %c0_i32 = arith.constant 0 : i32
    %c0_i32_0 = arith.constant 0 : i32
    return %c0_i32, %arg1 : i32, i32
  }
  func.func @transform_3(%arg0: i32, %arg1: i32) -> (i32, i32) {
    %c0_i32 = arith.constant 0 : i32
    return %arg0, %arg1 : i32, i32
  }
}

</mosaic_0001>

<llo_original>
// kernel: tpu_custom_call.1
$region0: #{tpu_custom_call.1}
  #allocation0 [shape = 'u32[]', space=smem, size = 0x4, offset = 0x4, fixed_abs, tag = 'smem constant byte address 0x4 - core index']
  #allocation1 [shape = 'u32[144,128]{1,0:T(1,128)}', space=vmem, size = 0x12000, scoped, tag = 'internal scratch']
  %s0 = inlined_call_operand.hbm [shape: bf16[16,32], index: 0, kind: input, shape index: {}]
  %s1 = inlined_call_operand.hbm [shape: bf16[32,32], index: 1, kind: input, shape index: {}]
  %s2 = inlined_call_operand.vmem [shape: f32[1,32], index: 2, kind: input, shape index: {}]
  %s3 = inlined_call_operand.hbm [shape: bf16[16,32], index: 3, kind: output, shape index: {}]
  %s4 = sld [smem:[#allocation0]]
  $region30: #{tpu_custom_call.1} parent=0
    _
  %s6 = ssub.s32 1, %s4
  %s7 = scalar_select 0, %s6, %s4
  $region1: #{tpu_custom_call.1} parent=0
    #allocation2 [shape = 'u8[4096]{0}', space=vmem, size = 0x1000, scoped, tag = 'input window, operand 0, single buffered']
    #allocation3 [shape = 's32[1]{0}', space=sflag, size = 0x4, scoped, tag = 'scoped memory for tpu_custom_call.1']
    #allocation4 [shape = 's32[1]{0}', space=sflag, size = 0x4, scoped, tag = 'scoped memory for tpu_custom_call.1']
    #allocation5 [shape = 'u8[8192]{0}', space=vmem, size = 0x2000, scoped, tag = 'input window, operand 1, single buffered']
    #allocation6 [shape = 's32[1]{0}', space=sflag, size = 0x4, scoped, tag = 'scoped memory for tpu_custom_call.1']
    #allocation7 [shape = 'u8[4096]{0}', space=vmem, size = 0x1000, scoped, tag = 'output window, operand 0, single buffered']
    %8 = vsyncpa [#allocation3], 0
    %9 = vsyncpa [#allocation6], 0
    %10 = vsyncpa [#allocation4], 0
    // Predicated region
    $region2: #{tpu_custom_call.1} parent=1 // pred_check
      _
    $region3: #{tpu_custom_call.1} parent=1 // pred_check_branch
      %12 = sbr.rel (0) target = $region5
    $region4: #{tpu_custom_call.1} parent=1 // pred_region
      %s14 = ssub.s32 128, 128
      %15 = vsyncadd [#allocation3], %s14
      %s16 = sshll.u32 [#allocation2], 4
      %s17 = int_to_ptr.vmem [resolvable:$true] %s16
      %22 = dma.hbm_to_vmem [thread:$0]  %s0, 128, %s17, [#allocation3], 64, 64, 4
    $region5: #{tpu_custom_call.1} parent=1 // pred_fallthru
      _
    // Predicated region
    $region6: #{tpu_custom_call.1} parent=1 // pred_check
      _
    $region7: #{tpu_custom_call.1} parent=1 // pred_check_branch
      %24 = sbr.rel (0) target = $region9
    $region8: #{tpu_custom_call.1} parent=1 // pred_region
      %s26 = ssub.s32 256, 256
      %27 = vsyncadd [#allocation6], %s26
      %s28 = sshll.u32 [#allocation5], 4
      %s29 = int_to_ptr.vmem [resolvable:$true] %s28
      %34 = dma.hbm_to_vmem [thread:$0]  %s1, 256, %s29, [#allocation6], 64, 64, 4
    $region9: #{tpu_custom_call.1} parent=1 // pred_fallthru
      _
    // Predicated region
    $region10: #{tpu_custom_call.1} parent=1 // pred_check
      _
    $region11: #{tpu_custom_call.1} parent=1 // pred_check_branch
      %36 = sbr.rel (0) target = $region13
    $region12: #{tpu_custom_call.1} parent=1 // pred_region
      _
    $region13: #{tpu_custom_call.1} parent=1 // pred_fallthru
      _
    // Predicated region
    $region14: #{tpu_custom_call.1} parent=1 // pred_check
      _
    $region15: #{tpu_custom_call.1} parent=1 // pred_check_branch
      %38 = sbr.rel (0) target = $region17
    $region16: #{tpu_custom_call.1} parent=1 // pred_region
      %39 = dma.done [#allocation3], 128
    $region17: #{tpu_custom_call.1} parent=1 // pred_fallthru
      _
    // Predicated region
    $region18: #{tpu_custom_call.1} parent=1 // pred_check
      _
    $region19: #{tpu_custom_call.1} parent=1 // pred_check_branch
      %41 = sbr.rel (0) target = $region21
    $region20: #{tpu_custom_call.1} parent=1 // pred_region
      %42 = dma.done [#allocation6], 256
    $region21: #{tpu_custom_call.1} parent=1 // pred_fallthru
      _
    %v44 = vld [vmem:[#allocation2] sm:$0xf]
    %v45 = vld [vmem:[#allocation2 + $0x4] sm:$0xf]
    %v46 = vld [vmem:[#allocation5] sm:$0xf]
    %v47 = vld [vmem:[#allocation5 + $0x4] sm:$0xf]
    %v48 = vld [vmem:[#allocation5 + $0x8] sm:$0xf]
    %v49 = vld [vmem:[#allocation5 + $0xc] sm:$0xf]
    %v50 = vld [vmem:[%s2] sm:$0x1]
    %v52 = vlaneseq
    %v53 = vshrl.u32 %v52, 7
    %v54 = vsub.s32 0, %v53
    %v55 = vrot.slane %v50, %v54
    %v59 = vunpack.c.l.b16 %v44
    %v60 = vunpack.c.l.b16 %v45
    %v61 = vpack.c.b16 %v60, %v59
    %v66 = vunpack.c.l.b16 %v46
    %v67 = vunpack.c.l.b16 %v47
    %v68 = vunpack.c.l.b16 %v48
    %v69 = vunpack.c.l.b16 %v49
    %v70 = vpack.c.b16 %v67, %v66
    %v71 = vpack.c.b16 %v69, %v68
    %vm74 = vcmask 261120
    %v76 = vsel %vm74, %v61, 0
    %78 = vmatprep.subr.bf16.mxu0 0
    %79 = vmatpush1.bf16.msra.mxu0 0
    %80 = vmatprep.subr.bf16.mxu0 0
    %81 = vmatpush1.bf16.msra.mxu0 0
    %82 = vmatprep.subr.bf16.mxu0 0
    %83 = vmatpush1.bf16.msra.mxu0 0
    %84 = vmatprep.subr.bf16.mxu0 0
    %85 = vmatpush1.bf16.msra.mxu0 0
    %86 = vmatprep.subr.bf16.mxu0 0
    %87 = vmatpush1.bf16.msra.mxu0 0
    %88 = vmatprep.subr.bf16.mxu0 0
    %89 = vmatpush1.bf16.msra.mxu0 0
    %90 = vmatprep.subr.bf16.mxu0 0
    %91 = vmatpush1.bf16.msra.mxu0 %v71
    %92 = vmatprep.subr.bf16.mxu0 0
    %93 = vmatpush1.bf16.msra.mxu0 %v70
    %94 = vmatprep.subr.bf16.mxu0 0
    %95 = vmatpush2.bf16.msra.mxu0 0
    %96 = vmatprep.subr.bf16.mxu0 0
    %97 = vmatpush2.bf16.msra.mxu0 0
    %98 = vmatprep.subr.bf16.mxu0 0
    %99 = vmatpush2.bf16.msra.mxu0 0
    %100 = vmatprep.subr.bf16.mxu0 0
    %101 = vmatpush2.bf16.msra.mxu0 0
    %102 = vmatprep.subr.bf16.mxu0 0
    %103 = vmatpush2.bf16.msra.mxu0 0
    %104 = vmatprep.subr.bf16.mxu0 0
    %105 = vmatpush2.bf16.msra.mxu0 0
    %106 = vmatprep.subr.bf16.mxu0 0
    %107 = vmatpush2.bf16.msra.mxu0 0
    %108 = vmatprep.subr.bf16.mxu0 0
    %109 = vmatpush2.bf16.msra.mxu0 0
    %110 = vmatprep.mubr.bf16.mxu0 0
    %111 = vmatmul.mubr.bf16.gmra.mxu0 %v76
    %v112 = vpop.f32.mrf.mxu0
    %v113 = vadd.f32 %v55, %v112
    %v114 = vpop.f32.mrf.mxu0
    %v115 = vpop.f32.mrf.mxu0
    %v116 = vadd.f32 %v55, %v115
    %v117 = vpop.f32.mrf.mxu0
    %118 = vdwg.mxu0
    %v119 = vpack.c.bf16 %v116, %v113
    %v121 = vunpack.c.l.b16 %v119
    %v122 = vunpack.c.h.b16 %v119
    %v123 = vpack.c.b16 %v121, %v121
    %v124 = vpack.c.b16 %v122, %v122
    %vm127 = vcmask 257024
    %128 = vst.msk [vmem:[#allocation7] sm:$0xf] %vm127, %v123
    %129 = vst.msk [vmem:[#allocation7 + $0x4] sm:$0xf] %vm127, %v124
    // Predicated region
    $region22: #{tpu_custom_call.1} parent=1 // pred_check
      _
    $region23: #{tpu_custom_call.1} parent=1 // pred_check_branch
      %131 = sbr.rel (0) target = $region25
    $region24: #{tpu_custom_call.1} parent=1 // pred_region
      %s133 = ssub.s32 128, 128
      %134 = vsyncadd [#allocation4], %s133
      %s135 = sshll.u32 [#allocation7], 4
      %s136 = int_to_ptr.vmem [resolvable:$true] %s135
      %141 = dma.vmem_to_hbm [thread:$0]  %s136, 128, %s3, [#allocation4], 64, 64, 4
    $region25: #{tpu_custom_call.1} parent=1 // pred_fallthru
      _
    // Predicated region
    $region26: #{tpu_custom_call.1} parent=1 // pred_check
      _
    $region27: #{tpu_custom_call.1} parent=1 // pred_check_branch
      %143 = sbr.rel (0) target = $region29
    $region28: #{tpu_custom_call.1} parent=1 // pred_region
      %144 = dma.done [#allocation4], 128
    $region29: #{tpu_custom_call.1} parent=1 // pred_fallthru
      _
    %145 = vsyncpa [#allocation3], 1
    %146 = vsyncpa [#allocation6], 1
    %147 = vsyncpa [#allocation4], 1

</llo_original>
